<compile_context>
chip_gen: v5e
topology: v5e:2x2
jax: 0.10.0
libtpu: 0.0.40
codegen_flags: <defaults>
</compile_context>

<pallas_src>
import functools
import math

import jax
import jax.numpy as jnp
from jax.experimental import pallas as pl
from jax.experimental.pallas import tpu as pltpu

SUBLANE = 8  # f32 sublane tile (rows)


def _fused_mlp_kernel(*refs, n_layers: int):
    """refs = (x_ref, w0, b0, w1, b1, ..., w_{L-1}, b_{L-1}, o_ref).

    Chain of bf16 MXU matmuls with f32 accumulation; bias add + ReLU on the VPU
    in f32.  Every intermediate activation stays in vregs/VMEM (never hits HBM).
    """
    x_ref = refs[0]
    o_ref = refs[-1]
    h = x_ref[...]                              # f32 activations
    for i in range(n_layers):
        w = refs[1 + 2 * i][...]                # bf16 (fan_in, fan_out)
        b = refs[2 + 2 * i][...]                # f32  (1, fan_out) -> broadcasts over rows
        h = jnp.dot(h.astype(w.dtype), w, preferred_element_type=jnp.float32) + b
        if i < n_layers - 1:                    # ReLU after every Linear except the last
            h = jnp.maximum(h, 0.0)
    o_ref[...] = h.astype(o_ref.dtype)


def init_mlp_params(key, in_features, hidden_dim, out_features, num_hidden_layers):
    """nn.Linear-style init: U(-1/sqrt(fan_in), +1/sqrt(fan_in)) for W and b.

    Returns logical f32 params: list of (w: (fan_in, fan_out), b: (fan_out,)).
    """
    dims = [in_features] + [hidden_dim] * num_hidden_layers + [out_features]
    params = []
    for i in range(len(dims) - 1):
        fan_in, fan_out = dims[i], dims[i + 1]
        key, kw, kb = jax.random.split(key, 3)
        bound = 1.0 / math.sqrt(fan_in)
        w = jax.random.uniform(kw, (fan_in, fan_out), jnp.float32, -bound, bound)
        b = jax.random.uniform(kb, (fan_out,), jnp.float32, -bound, bound)
        params.append((w, b))
    return params


def prep_mlp_params(params):
    """One-time prep for the kernel: bf16 weights (native MXU dtype on all
    generations), f32 biases reshaped to (1, fan_out) so no per-call reshape."""
    prepped = []
    for w, b in params:
        prepped.append((w.astype(jnp.bfloat16), b.reshape(1, -1).astype(jnp.float32)))
    return prepped


def mlp_forward(x, kernel_params):
    """Fused MLP forward: one pallas_call over the whole layer stack."""
    batch, in_f = x.shape
    n_layers = len(kernel_params)
    out_f = kernel_params[-1][0].shape[1]

    # Pad rows only when batch isn't a sublane multiple (no extra XLA ops otherwise).
    row_pad = (-batch) % SUBLANE
    x_in = jnp.pad(x, ((0, row_pad), (0, 0))) if row_pad else x
    batch_eff = batch + row_pad

    flat = []
    for w, b in kernel_params:
        flat.extend((w, b))

    # Full-extent blocks: everything (~23 KiB bf16 weights + tiny f32
    # activations) sits in VMEM; no (8,128) padding needed for full blocks.
    in_specs = [pl.BlockSpec(x_in.shape, lambda: (0, 0))]
    for arr in flat:
        in_specs.append(pl.BlockSpec(arr.shape, lambda: (0, 0)))

    # Honest cost estimate on the true (unpadded) shapes / dtypes.
    flops = 2 * batch_eff * sum(w.shape[0] * w.shape[1] for w, _ in kernel_params)
    bytes_accessed = (x_in.size * 4
                      + sum(w.size * 2 + b.size * 4 for w, b in kernel_params)
                      + batch_eff * out_f * 4)

    kernel = functools.partial(_fused_mlp_kernel, n_layers=n_layers)
    out = pl.pallas_call(
        kernel,
        out_shape=jax.ShapeDtypeStruct((batch_eff, out_f), x.dtype),
        in_specs=in_specs,
        out_specs=pl.BlockSpec((batch_eff, out_f), lambda: (0, 0)),
        compiler_params=pltpu.CompilerParams(
            # Fused footprint is <100 KiB even double-buffered; 8 MiB leaves
            # headroom and is under every generation's scoped VMEM default.
            vmem_limit_bytes=8 << 20,
        ),
        cost_estimate=pl.CostEstimate(
            flops=flops, transcendentals=0, bytes_accessed=bytes_accessed),
    )(x_in, *flat)

    return out[:batch] if row_pad else out


if __name__ == "__main__":
    # Small shapes consistent with the module's forward.
    batch = 8
    in_features = 32
    hidden_dim = 64
    out_features = 16
    num_hidden_layers = 3

    key = jax.random.PRNGKey(0)
    key, kx = jax.random.split(key)
    x = jax.random.normal(kx, (batch, in_features), jnp.float32)

    params = init_mlp_params(key, in_features, hidden_dim, out_features,
                             num_hidden_layers)
    kernel_params = prep_mlp_params(params)

    out = mlp_forward(x, kernel_params)
    out = jax.block_until_ready(out)

    # Reference with the SAME math (bf16 matmul operands, f32 accumulation,
    # f32 bias/ReLU) in plain JAX.
    ref = x
    for i, (w, b) in enumerate(params):
        ref = jnp.dot(ref.astype(jnp.bfloat16), w.astype(jnp.bfloat16),
                      preferred_element_type=jnp.float32) + b
        if i < len(params) - 1:
            ref = jnp.maximum(ref, 0.0)

    # Loose sanity check against the pure-f32 reference (bf16 rounding ~1e-2).
    ref32 = x
    for i, (w, b) in enumerate(params):
        ref32 = ref32 @ w + b
        if i < len(params) - 1:
            ref32 = jnp.maximum(ref32, 0.0)

    assert out.shape == (batch, out_features)
    assert jnp.allclose(out, ref, atol=5e-3, rtol=5e-3)
    assert jnp.allclose(out, ref32, atol=1e-1, rtol=1e-1)

    print("KERNEL_OK")
</pallas_src>

<mosaic_0001>
module attributes {stable_mosaic.version = 11 : i64} {
  func.func @_fused_mlp_kernel(%arg0: memref<8x32xf32, #tpu.memory_space<vmem>>, %arg1: memref<32x64xbf16, #tpu.memory_space<vmem>>, %arg2: memref<1x64xf32, #tpu.memory_space<vmem>>, %arg3: memref<64x64xbf16, #tpu.memory_space<vmem>>, %arg4: memref<1x64xf32, #tpu.memory_space<vmem>>, %arg5: memref<64x64xbf16, #tpu.memory_space<vmem>>, %arg6: memref<1x64xf32, #tpu.memory_space<vmem>>, %arg7: memref<64x16xbf16, #tpu.memory_space<vmem>>, %arg8: memref<1x16xf32, #tpu.memory_space<vmem>>, %arg9: memref<8x16xf32, #tpu.memory_space<vmem>>) attributes {dimension_semantics = [], scalar_prefetch = 0 : i64, scratch_operands = 0 : i64, tpu.core_type = #tpu.core_type<tc>} {
    %c0 = arith.constant 0 : index
    %c0_0 = arith.constant 0 : index
    %0 = vector.load %arg0[%c0, %c0_0] : memref<8x32xf32, #tpu.memory_space<vmem>>, vector<8x32xf32>
    %c0_1 = arith.constant 0 : index
    %c0_2 = arith.constant 0 : index
    %1 = vector.load %arg1[%c0_1, %c0_2] : memref<32x64xbf16, #tpu.memory_space<vmem>>, vector<32x64xbf16>
    %c0_3 = arith.constant 0 : index
    %c0_4 = arith.constant 0 : index
    %2 = vector.load %arg2[%c0_3, %c0_4] : memref<1x64xf32, #tpu.memory_space<vmem>>, vector<1x64xf32>
    %3 = arith.truncf %0 : vector<8x32xf32> to vector<8x32xbf16>
    %cst = arith.constant dense<0.000000e+00> : vector<8x64xf32>
    %4 = tpu.matmul %3, %1, %cst {dimension_numbers = #tpu.dot_dimension_numbers<[1], [0], [0], [1], [0, 0, 1, 1], [], []>} : vector<8x32xbf16>, vector<32x64xbf16>, vector<8x64xf32> -> vector<8x64xf32>
    %5 = vector.broadcast %2 : vector<1x64xf32> to vector<8x64xf32>
    %6 = arith.addf %4, %5 : vector<8x64xf32>
    %cst_5 = arith.constant 0.000000e+00 : f32
    %7 = vector.broadcast %cst_5 : f32 to vector<8x64xf32>
    %8 = arith.maximumf %6, %7 : vector<8x64xf32>
    %c0_6 = arith.constant 0 : index
    %c0_7 = arith.constant 0 : index
    %9 = vector.load %arg3[%c0_6, %c0_7] : memref<64x64xbf16, #tpu.memory_space<vmem>>, vector<64x64xbf16>
    %c0_8 = arith.constant 0 : index
    %c0_9 = arith.constant 0 : index
    %10 = vector.load %arg4[%c0_8, %c0_9] : memref<1x64xf32, #tpu.memory_space<vmem>>, vector<1x64xf32>
    %11 = arith.truncf %8 : vector<8x64xf32> to vector<8x64xbf16>
    %cst_10 = arith.constant dense<0.000000e+00> : vector<8x64xf32>
    %12 = tpu.matmul %11, %9, %cst_10 {dimension_numbers = #tpu.dot_dimension_numbers<[1], [0], [0], [1], [0, 0, 1, 1], [], []>} : vector<8x64xbf16>, vector<64x64xbf16>, vector<8x64xf32> -> vector<8x64xf32>
    %13 = vector.broadcast %10 : vector<1x64xf32> to vector<8x64xf32>
    %14 = arith.addf %12, %13 : vector<8x64xf32>
    %cst_11 = arith.constant 0.000000e+00 : f32
    %15 = vector.broadcast %cst_11 : f32 to vector<8x64xf32>
    %16 = arith.maximumf %14, %15 : vector<8x64xf32>
    %c0_12 = arith.constant 0 : index
    %c0_13 = arith.constant 0 : index
    %17 = vector.load %arg5[%c0_12, %c0_13] : memref<64x64xbf16, #tpu.memory_space<vmem>>, vector<64x64xbf16>
    %c0_14 = arith.constant 0 : index
    %c0_15 = arith.constant 0 : index
    %18 = vector.load %arg6[%c0_14, %c0_15] : memref<1x64xf32, #tpu.memory_space<vmem>>, vector<1x64xf32>
    %19 = arith.truncf %16 : vector<8x64xf32> to vector<8x64xbf16>
    %cst_16 = arith.constant dense<0.000000e+00> : vector<8x64xf32>
    %20 = tpu.matmul %19, %17, %cst_16 {dimension_numbers = #tpu.dot_dimension_numbers<[1], [0], [0], [1], [0, 0, 1, 1], [], []>} : vector<8x64xbf16>, vector<64x64xbf16>, vector<8x64xf32> -> vector<8x64xf32>
    %21 = vector.broadcast %18 : vector<1x64xf32> to vector<8x64xf32>
    %22 = arith.addf %20, %21 : vector<8x64xf32>
    %cst_17 = arith.constant 0.000000e+00 : f32
    %23 = vector.broadcast %cst_17 : f32 to vector<8x64xf32>
    %24 = arith.maximumf %22, %23 : vector<8x64xf32>
    %c0_18 = arith.constant 0 : index
    %c0_19 = arith.constant 0 : index
    %25 = vector.load %arg7[%c0_18, %c0_19] : memref<64x16xbf16, #tpu.memory_space<vmem>>, vector<64x16xbf16>
    %c0_20 = arith.constant 0 : index
    %c0_21 = arith.constant 0 : index
    %26 = vector.load %arg8[%c0_20, %c0_21] : memref<1x16xf32, #tpu.memory_space<vmem>>, vector<1x16xf32>
    %27 = arith.truncf %24 : vector<8x64xf32> to vector<8x64xbf16>
    %cst_22 = arith.constant dense<0.000000e+00> : vector<8x16xf32>
    %28 = tpu.matmul %27, %25, %cst_22 {dimension_numbers = #tpu.dot_dimension_numbers<[1], [0], [0], [1], [0, 0, 1, 1], [], []>} : vector<8x64xbf16>, vector<64x16xbf16>, vector<8x16xf32> -> vector<8x16xf32>
    %29 = vector.broadcast %26 : vector<1x16xf32> to vector<8x16xf32>
    %30 = arith.addf %28, %29 : vector<8x16xf32>
    %c0_23 = arith.constant 0 : index
    %c0_24 = arith.constant 0 : index
    %31 = vector.load %arg9[%c0_23, %c0_24] : memref<8x16xf32, #tpu.memory_space<vmem>>, vector<8x16xf32>
    tpu.vector_store %arg9[%c0_23, %c0_24], %30 {strides = array<i32>} : memref<8x16xf32, #tpu.memory_space<vmem>>, vector<8x16xf32>,
    return
  }
}

</mosaic_0001>

<llo_original>
// kernel: tpu_custom_call.1
$region0: #{tpu_custom_call.1}
  #allocation0 [shape = 'u32[]', space=smem, size = 0x4, offset = 0x4, fixed_abs, tag = 'smem constant byte address 0x4 - core index']
  #allocation1 [shape = 'u32[72,128]{1,0:T(1,128)}', space=vmem, size = 0x9000, scoped, tag = 'internal scratch']
  %s0 = inlined_call_operand.vmem [shape: f32[8,32], index: 0, kind: input, shape index: {}]
  %s1 = inlined_call_operand.hbm [shape: bf16[32,64], index: 1, kind: input, shape index: {}]
  %s2 = inlined_call_operand.vmem [shape: f32[1,64], index: 2, kind: input, shape index: {}]
  %s3 = inlined_call_operand.vmem [shape: bf16[64,64], index: 3, kind: input, shape index: {}]
  %s4 = inlined_call_operand.vmem [shape: f32[1,64], index: 4, kind: input, shape index: {}]
  %s5 = inlined_call_operand.hbm [shape: bf16[64,64], index: 5, kind: input, shape index: {}]
  %s6 = inlined_call_operand.vmem [shape: f32[1,64], index: 6, kind: input, shape index: {}]
  %s7 = inlined_call_operand.vmem [shape: bf16[64,16], index: 7, kind: input, shape index: {}]
  %s8 = inlined_call_operand.vmem [shape: f32[1,16], index: 8, kind: input, shape index: {}]
  %s9 = inlined_call_operand.hbm [shape: f32[8,16], index: 9, kind: output, shape index: {}]
  %s10 = sld [smem:[#allocation0]]
  $region54: #{tpu_custom_call.1} parent=0
    _
  %s12 = ssub.s32 1, %s10
  %s13 = scalar_select 0, %s12, %s10
  $region1: #{tpu_custom_call.1} parent=0
    #allocation2 [shape = 'u8[8192]{0}', space=vmem, size = 0x2000, scoped, tag = 'input window, operand 1, single buffered']
    #allocation3 [shape = 's32[1]{0}', space=sflag, size = 0x4, scoped, tag = 'scoped memory for tpu_custom_call.1']
    #allocation4 [shape = 's32[1]{0}', space=sflag, size = 0x4, scoped, tag = 'scoped memory for tpu_custom_call.1']
    #allocation5 [shape = 'u8[16384]{0}', space=vmem, size = 0x4000, scoped, tag = 'input window, operand 5, single buffered']
    #allocation6 [shape = 's32[1]{0}', space=sflag, size = 0x4, scoped, tag = 'scoped memory for tpu_custom_call.1']
    #allocation7 [shape = 'u8[4096]{0}', space=vmem, size = 0x1000, scoped, tag = 'output window, operand 0, single buffered']
    %14 = vsyncpa [#allocation3], 0
    %15 = vsyncpa [#allocation6], 0
    %16 = vsyncpa [#allocation4], 0
    // Predicated region
    $region2: #{tpu_custom_call.1} parent=1 // pred_check
      _
    $region3: #{tpu_custom_call.1} parent=1 // pred_check_branch
      %18 = sbr.rel (0) target = $region5
    $region4: #{tpu_custom_call.1} parent=1 // pred_region
      _
    $region5: #{tpu_custom_call.1} parent=1 // pred_fallthru
      _
    // Predicated region
    $region6: #{tpu_custom_call.1} parent=1 // pred_check
      _
    $region7: #{tpu_custom_call.1} parent=1 // pred_check_branch
      %20 = sbr.rel (0) target = $region9
    $region8: #{tpu_custom_call.1} parent=1 // pred_region
      %22 = vsyncadd [#allocation3], 0
      %s23 = sshll.u32 %s1, 4
      %s24 = int_to_ptr.hbm [resolvable:$true] %s23
      %s25 = sshll.u32 [#allocation2], 4
      %s26 = int_to_ptr.vmem [resolvable:$true] %s25
      %31 = dma.hbm_to_vmem [thread:$0]  %s24, 256, %s26, [#allocation3], 64, 64, 4
    $region9: #{tpu_custom_call.1} parent=1 // pred_fallthru
      _
    // Predicated region
    $region10: #{tpu_custom_call.1} parent=1 // pred_check
      _
    $region11: #{tpu_custom_call.1} parent=1 // pred_check_branch
      %33 = sbr.rel (0) target = $region13
    $region12: #{tpu_custom_call.1} parent=1 // pred_region
      _
    $region13: #{tpu_custom_call.1} parent=1 // pred_fallthru
      _
    // Predicated region
    $region14: #{tpu_custom_call.1} parent=1 // pred_check
      _
    $region15: #{tpu_custom_call.1} parent=1 // pred_check_branch
      %35 = sbr.rel (0) target = $region17
    $region16: #{tpu_custom_call.1} parent=1 // pred_region
      _
    $region17: #{tpu_custom_call.1} parent=1 // pred_fallthru
      _
    // Predicated region
    $region18: #{tpu_custom_call.1} parent=1 // pred_check
      _
    $region19: #{tpu_custom_call.1} parent=1 // pred_check_branch
      %37 = sbr.rel (0) target = $region21
    $region20: #{tpu_custom_call.1} parent=1 // pred_region
      _
    $region21: #{tpu_custom_call.1} parent=1 // pred_fallthru
      _
    // Predicated region
    $region22: #{tpu_custom_call.1} parent=1 // pred_check
      _
    $region23: #{tpu_custom_call.1} parent=1 // pred_check_branch
      %39 = sbr.rel (0) target = $region25
    $region24: #{tpu_custom_call.1} parent=1 // pred_region
      %41 = vsyncadd [#allocation6], 0
      %s42 = sshll.u32 %s5, 4
      %s43 = int_to_ptr.hbm [resolvable:$true] %s42
      %s44 = sshll.u32 [#allocation5], 4
      %s45 = int_to_ptr.vmem [resolvable:$true] %s44
      %50 = dma.hbm_to_vmem [thread:$0]  %s43, 512, %s45, [#allocation6], 64, 64, 4
    $region25: #{tpu_custom_call.1} parent=1 // pred_fallthru
      _
    // Predicated region
    $region26: #{tpu_custom_call.1} parent=1 // pred_check
      _
    $region27: #{tpu_custom_call.1} parent=1 // pred_check_branch
      %52 = sbr.rel (0) target = $region29
    $region28: #{tpu_custom_call.1} parent=1 // pred_region
      _
    $region29: #{tpu_custom_call.1} parent=1 // pred_fallthru
      _
    // Predicated region
    $region30: #{tpu_custom_call.1} parent=1 // pred_check
      _
    $region31: #{tpu_custom_call.1} parent=1 // pred_check_branch
      %54 = sbr.rel (0) target = $region33
    $region32: #{tpu_custom_call.1} parent=1 // pred_region
      _
    $region33: #{tpu_custom_call.1} parent=1 // pred_fallthru
      _
    // Predicated region
    $region34: #{tpu_custom_call.1} parent=1 // pred_check
      _
    $region35: #{tpu_custom_call.1} parent=1 // pred_check_branch
      %56 = sbr.rel (0) target = $region37
    $region36: #{tpu_custom_call.1} parent=1 // pred_region
      _
    $region37: #{tpu_custom_call.1} parent=1 // pred_fallthru
      _
    // Predicated region
    $region38: #{tpu_custom_call.1} parent=1 // pred_check
      _
    $region39: #{tpu_custom_call.1} parent=1 // pred_check_branch
      %58 = sbr.rel (0) target = $region41
    $region40: #{tpu_custom_call.1} parent=1 // pred_region
      %60 = dma.done [#allocation3], 256
    $region41: #{tpu_custom_call.1} parent=1 // pred_fallthru
      _
    // Predicated region
    $region42: #{tpu_custom_call.1} parent=1 // pred_check
      _
    $region43: #{tpu_custom_call.1} parent=1 // pred_check_branch
      %62 = sbr.rel (0) target = $region45
    $region44: #{tpu_custom_call.1} parent=1 // pred_region
      %64 = dma.done [#allocation6], 512
    $region45: #{tpu_custom_call.1} parent=1 // pred_fallthru
      _
    %v66 = vld [vmem:[%s0] sm:$0xff]
    %v67 = vld [vmem:[#allocation2] sm:$0xf]
    %v68 = vld [vmem:[#allocation2 + $0x4] sm:$0xf]
    %v69 = vld [vmem:[#allocation2 + $0x8] sm:$0xf]
    %v70 = vld [vmem:[#allocation2 + $0xc] sm:$0xf]
    %v71 = vld [vmem:[%s2] sm:$0x1]
    %v72 = vpack.c.bf16 %v66, %v66
    %v74 = vperm.slane %v71, 0
    %v80 = vunpack.c.l.b16 %v67
    %v81 = vunpack.c.l.b16 %v68
    %v82 = vunpack.c.l.b16 %v69
    %v83 = vunpack.c.l.b16 %v70
    %v84 = vpack.c.b16 %v81, %v80
    %v85 = vpack.c.b16 %v83, %v82
    %vm88 = vcmask 261120
    %v90 = vsel %vm88, %v72, 0
    %92 = vmatpush.bf16.msra.mxu0 0
    %93 = vmatpush.bf16.msra.mxu0 0
    %94 = vmatpush.bf16.msra.mxu0 0
    %95 = vmatpush.bf16.msra.mxu0 0
    %96 = vmatpush.bf16.msra.mxu0 0
    %97 = vmatpush.bf16.msra.mxu0 0
    %98 = vmatpush.bf16.msra.mxu0 %v85
    %99 = vmatpush.bf16.msra.mxu0 %v84
    %100 = vmatmul.bf16.gmra.mxu0 %v90
    %v101 = vpop.f32.mrf.mxu0
    %v102 = vadd.f32 %v74, %v101
    %v103 = vpop.f32.mrf.mxu0
    %104 = vdwg.mxu0
    %v105 = vmax.f32 %v102, 0.0
    %v106 = vld [vmem:[%s3] sm:$0xf]
    %v107 = vld [vmem:[%s3 + $0x4] sm:$0xf]
    %v108 = vld [vmem:[%s3 + $0x8] sm:$0xf]
    %v109 = vld [vmem:[%s3 + $0xc] sm:$0xf]
    %v110 = vld [vmem:[%s3 + $0x10] sm:$0xf]
    %v111 = vld [vmem:[%s3 + $0x14] sm:$0xf]
    %v112 = vld [vmem:[%s3 + $0x18] sm:$0xf]
    %v113 = vld [vmem:[%s3 + $0x1c] sm:$0xf]
    %v114 = vld [vmem:[%s4] sm:$0x1]
    %v115 = vpack.c.bf16 %v105, %v105
    %v117 = vperm.slane %v114, 0
    %v127 = vunpack.c.l.b16 %v106
    %v128 = vunpack.c.l.b16 %v107
    %v129 = vunpack.c.l.b16 %v108
    %v130 = vunpack.c.l.b16 %v109
    %v131 = vunpack.c.l.b16 %v110
    %v132 = vunpack.c.l.b16 %v111
    %v133 = vunpack.c.l.b16 %v112
    %v134 = vunpack.c.l.b16 %v113
    %v135 = vpack.c.b16 %v128, %v127
    %v136 = vpack.c.b16 %v130, %v129
    %v137 = vpack.c.b16 %v132, %v131
    %v138 = vpack.c.b16 %v134, %v133
    %vm143 = vcmask 523264
    %v145 = vsel %vm143, %v115, 0
    %147 = vmatpush.bf16.msra.mxu0 0
    %148 = vmatpush.bf16.msra.mxu0 0
    %149 = vmatpush.bf16.msra.mxu0 0
    %150 = vmatpush.bf16.msra.mxu0 0
    %151 = vmatpush.bf16.msra.mxu0 %v138
    %152 = vmatpush.bf16.msra.mxu0 %v137
    %153 = vmatpush.bf16.msra.mxu0 %v136
    %154 = vmatpush.bf16.msra.mxu0 %v135
    %155 = vmatmul.bf16.gmra.mxu0 %v145
    %v156 = vpop.f32.mrf.mxu0
    %v157 = vadd.f32 %v117, %v156
    %v158 = vpop.f32.mrf.mxu0
    %159 = vdwg.mxu0
    %v160 = vmax.f32 %v157, 0.0
    %v161 = vld [vmem:[#allocation5] sm:$0xf]
    %v162 = vld [vmem:[#allocation5 + $0x4] sm:$0xf]
    %v163 = vld [vmem:[#allocation5 + $0x8] sm:$0xf]
    %v164 = vld [vmem:[#allocation5 + $0xc] sm:$0xf]
    %v165 = vld [vmem:[#allocation5 + $0x10] sm:$0xf]
    %v166 = vld [vmem:[#allocation5 + $0x14] sm:$0xf]
    %v167 = vld [vmem:[#allocation5 + $0x18] sm:$0xf]
    %v168 = vld [vmem:[#allocation5 + $0x1c] sm:$0xf]
    %v169 = vld [vmem:[%s6] sm:$0x1]
    %v170 = vpack.c.bf16 %v160, %v160
    %v172 = vperm.slane %v169, 0
    %v182 = vunpack.c.l.b16 %v161
    %v183 = vunpack.c.l.b16 %v162
    %v184 = vunpack.c.l.b16 %v163
    %v185 = vunpack.c.l.b16 %v164
    %v186 = vunpack.c.l.b16 %v165
    %v187 = vunpack.c.l.b16 %v166
    %v188 = vunpack.c.l.b16 %v167
    %v189 = vunpack.c.l.b16 %v168
    %v190 = vpack.c.b16 %v183, %v182
    %v191 = vpack.c.b16 %v185, %v184
    %v192 = vpack.c.b16 %v187, %v186
    %v193 = vpack.c.b16 %v189, %v188
    %v199 = vsel %vm143, %v170, 0
    %201 = vmatpush.bf16.msra.mxu0 0
    %202 = vmatpush.bf16.msra.mxu0 0
    %203 = vmatpush.bf16.msra.mxu0 0
    %204 = vmatpush.bf16.msra.mxu0 0
    %205 = vmatpush.bf16.msra.mxu0 %v193
    %206 = vmatpush.bf16.msra.mxu0 %v192
    %207 = vmatpush.bf16.msra.mxu0 %v191
    %208 = vmatpush.bf16.msra.mxu0 %v190
    %209 = vmatmul.bf16.gmra.mxu0 %v199
    %v210 = vpop.f32.mrf.mxu0
    %v211 = vadd.f32 %v172, %v210
    %v212 = vpop.f32.mrf.mxu0
    %213 = vdwg.mxu0
    %v214 = vmax.f32 %v211, 0.0
    %v215 = vld [vmem:[%s7] sm:$0xf]
    %v216 = vld [vmem:[%s7 + $0x4] sm:$0xf]
    %v217 = vld [vmem:[%s7 + $0x8] sm:$0xf]
    %v218 = vld [vmem:[%s7 + $0xc] sm:$0xf]
    %v219 = vld [vmem:[%s7 + $0x10] sm:$0xf]
    %v220 = vld [vmem:[%s7 + $0x14] sm:$0xf]
    %v221 = vld [vmem:[%s7 + $0x18] sm:$0xf]
    %v222 = vld [vmem:[%s7 + $0x1c] sm:$0xf]
    %v223 = vld [vmem:[%s8] sm:$0x1]
    %v224 = vpack.c.bf16 %v214, %v214
    %v226 = vperm.slane %v223, 0
    %v236 = vunpack.c.l.b16 %v215
    %v237 = vunpack.c.l.b16 %v216
    %v238 = vunpack.c.l.b16 %v217
    %v239 = vunpack.c.l.b16 %v218
    %v240 = vunpack.c.l.b16 %v219
    %v241 = vunpack.c.l.b16 %v220
    %v242 = vunpack.c.l.b16 %v221
    %v243 = vunpack.c.l.b16 %v222
    %v244 = vpack.c.b16 %v237, %v236
    %v245 = vpack.c.b16 %v239, %v238
    %v246 = vpack.c.b16 %v241, %v240
    %v247 = vpack.c.b16 %v243, %v242
    %v253 = vsel %vm143, %v224, 0
    %255 = vmatpush.bf16.msra.mxu0 0
    %256 = vmatpush.bf16.msra.mxu0 0
    %257 = vmatpush.bf16.msra.mxu0 0
    %258 = vmatpush.bf16.msra.mxu0 0
    %259 = vmatpush.bf16.msra.mxu0 %v247
    %260 = vmatpush.bf16.msra.mxu0 %v246
    %261 = vmatpush.bf16.msra.mxu0 %v245
    %262 = vmatpush.bf16.msra.mxu0 %v244
    %263 = vmatmul.bf16.gmra.mxu0 %v253
    %v264 = vpop.f32.mrf.mxu0
    %v265 = vadd.f32 %v226, %v264
    %v266 = vpop.f32.mrf.mxu0
    %267 = vdwg.mxu0
    %vm268 = vcmask 130048
    %269 = vst.msk [vmem:[#allocation7] sm:$0xff] %vm268, %v265
    // Predicated region
    $region46: #{tpu_custom_call.1} parent=1 // pred_check
      _
    $region47: #{tpu_custom_call.1} parent=1 // pred_check_branch
      %271 = sbr.rel (0) target = $region49
    $region48: #{tpu_custom_call.1} parent=1 // pred_region
      %273 = vsyncadd [#allocation4], 0
      %s275 = sshll.u32 [#allocation7], 4
      %s276 = int_to_ptr.vmem [resolvable:$true] %s275
      %s277 = sshll.u32 %s9, 4
      %s278 = int_to_ptr.hbm [resolvable:$true] %s277
      %280 = dma.vmem_to_hbm [thread:$0]  %s276, 128, %s278, [#allocation4]
    $region49: #{tpu_custom_call.1} parent=1 // pred_fallthru
      _
    // Predicated region
    $region50: #{tpu_custom_call.1} parent=1 // pred_check
      _
    $region51: #{tpu_custom_call.1} parent=1 // pred_check_branch
      %282 = sbr.rel (0) target = $region53
    $region52: #{tpu_custom_call.1} parent=1 // pred_region
      %284 = dma.done [#allocation4], 128
    $region53: #{tpu_custom_call.1} parent=1 // pred_fallthru
      _
    %285 = vsyncpa [#allocation3], 1
    %286 = vsyncpa [#allocation6], 1
    %287 = vsyncpa [#allocation4], 1

</llo_original>
